<compile_context>
chip_gen: v6e
topology: v6e:2x2x1
jax: 0.10.0
libtpu: 0.0.40
codegen_flags: <defaults>
</compile_context>

<pallas_src>
import numpy as np
import jax
import jax.numpy as jnp
from jax.experimental import pallas as pl
from jax.experimental.pallas import tpu as pltpu


# ----------------------------------------------------------------------------
# Deterministic parameter initialization (mirrors InvConv.__init__ with lu=True)
# ----------------------------------------------------------------------------
def _lu_decompose(a):
    """Plain-numpy LU with partial pivoting, matching scipy.linalg.lu:
    returns (p, l, u) with a = p @ l @ u."""
    a = np.array(a, dtype=np.float64, copy=True)
    n = a.shape[0]
    U = a.copy()
    L = np.eye(n)
    P = np.eye(n)
    for k in range(n - 1):
        piv = int(np.argmax(np.abs(U[k:, k]))) + k
        if piv != k:
            U[[k, piv], :] = U[[piv, k], :]
            P[[k, piv], :] = P[[piv, k], :]
            L[[k, piv], :k] = L[[piv, k], :k]
        for i in range(k + 1, n):
            L[i, k] = U[i, k] / U[k, k]
            U[i, :] -= L[i, k] * U[k, :]
    return P.T, L, U  # a = P.T @ L @ U


def make_invconv_params(channels, seed=0):
    rng = np.random.RandomState(seed)
    w_init = np.linalg.qr(rng.randn(channels, channels))[0].astype(np.float64)
    np_p, np_l, np_u = _lu_decompose(w_init)
    np_s = np.diag(np_u)
    return dict(
        p=jnp.asarray(np_p, dtype=jnp.float32),
        sign_s=jnp.asarray(np.sign(np_s), dtype=jnp.float32),
        l=jnp.asarray(np_l, dtype=jnp.float32),
        log_s=jnp.asarray(np.log(np.abs(np_s)), dtype=jnp.float32),
        u=jnp.asarray(np.triu(np_u, k=1), dtype=jnp.float32),
        l_mask=jnp.asarray(np.tril(np.ones((channels, channels)), -1),
                           dtype=jnp.float32),
        eye=jnp.eye(channels, dtype=jnp.float32),
    )


def get_weight(params, reverse=False):
    """Weight reconstruction (glue, plain JAX). Matches InvConv.get_weight."""
    l = params["l"] * params["l_mask"] + params["eye"]
    u = (params["u"] * params["l_mask"].T
         + jnp.diag(params["sign_s"] * jnp.exp(params["log_s"])))
    dlogdet = jnp.sum(params["log_s"])
    if not reverse:
        w = params["p"] @ (l @ u)                        # (C_out, C_in)
    else:
        l_inv = jnp.linalg.inv(l)
        u_inv = jnp.linalg.inv(u)
        w = u_inv @ (l_inv @ jnp.linalg.inv(params["p"]))
    return w, dlogdet


# ----------------------------------------------------------------------------
# Pallas kernels: 1x1 conv == per-timestep channel mixing, T on the lane axis
# ----------------------------------------------------------------------------
_VPU_C_THRESHOLD = 8       # C <= threshold -> unrolled VPU FMA path (no MXU)


def _invconv_kernel_vpu(w_ref, x_ref, o_ref):
    # w_ref: VMEM (C, C) f32, resident (constant index_map -> never re-DMA'd)
    # x_ref/o_ref: VMEM (C, tile_t), batch dim squeezed, T on the lane axis.
    c = x_ref.shape[0]
    w = w_ref[...]                                          # read W once
    # z[:, t] = W @ x[:, t]  ==  sum_j W[:, j] (x) x[j, :]
    # Column-broadcast FMA chain on the VPU. bf16 rows are cast per-row, so no
    # full-tile f32 copy of x is materialized. Single full-tile store at the end.
    acc = w[:, 0:1] * x_ref[0:1, :].astype(jnp.float32)
    for j in range(1, c):
        acc = acc + w[:, j:j + 1] * x_ref[j:j + 1, :].astype(jnp.float32)
    o_ref[...] = acc.astype(o_ref.dtype)


def _invconv_kernel_mxu(w_ref, x_ref, o_ref):
    # w_ref: VMEM (C, C); x_ref/o_ref: VMEM (C, tile_t)
    o_ref[...] = jnp.dot(w_ref[...], x_ref[...],
                         preferred_element_type=jnp.float32).astype(o_ref.dtype)


# ----------------------------------------------------------------------------
# Generation-aware tiling
# ----------------------------------------------------------------------------
def _vmem_plan():
    """Returns (tiling_budget_bytes, vmem_limit_bytes), generation aware."""
    cap = 64 * 1024 * 1024                       # conservative default (v7x)
    try:
        cap = int(getattr(pltpu.get_tpu_info(), "vmem_capacity_bytes", cap))
    except Exception:
        pass
    if cap >= 128 * 1024 * 1024:                 # v5e / v6e: 128 MiB VMEM
        return 64 * 1024 * 1024, 96 * 1024 * 1024
    # v7x: 64 MiB per TensorCore -> keep in-flight well under the limit
    return 28 * 1024 * 1024, 44 * 1024 * 1024


def _choose_tile_t(b, c, t, itemsize, budget_bytes):
    if t <= 512:
        return t                                 # full axis (== array dim) is legal
    c_pad = max(c, 8)                            # sublane padding when C < 8
    # In-flight bytes per grid step: 2 x-blocks + 2 z-blocks (double-buffered)
    # + one f32 accumulator / temporaries inside the kernel body.
    per_elem_bytes = 4 * itemsize + 4
    vmem_tile = budget_bytes // (per_elem_bytes * c_pad)
    block_tile = (8 * 1024 * 1024) // (c_pad * itemsize)    # ~8 MiB per block
    tile = min(t, vmem_tile, block_tile)
    # Keep >= ~8 total grid steps so both v7x TensorCores get pipelined work.
    min_steps = 8
    if b * (-(-t // max(tile, 1))) < min_steps:
        steps_per_batch = -(-min_steps // b)
        tile = min(tile, max(512, -(-t // steps_per_batch)))
    tile = max(128, (tile // 128) * 128)         # 128-aligned lane dimension
    return tile


def invconv_conv1d(x, w):
    """z[b, i, t] = sum_j w[i, j] * x[b, j, t]  (F.conv1d with kernel size 1)."""
    b, c, t = x.shape
    budget, vmem_limit = _vmem_plan()
    tile_t = _choose_tile_t(b, c, t, x.dtype.itemsize, budget)
    grid = (b, pl.cdiv(t, tile_t))               # ragged tail handled by Pallas

    x_spec = pl.BlockSpec((None, c, tile_t), lambda bb, ti: (bb, 0, ti))
    o_spec = pl.BlockSpec((None, c, tile_t), lambda bb, ti: (bb, 0, ti))
    w_spec = pl.BlockSpec((c, c), lambda bb, ti: (0, 0))     # resident weight

    if c <= _VPU_C_THRESHOLD:
        kernel = _invconv_kernel_vpu
        w_arg = w.astype(jnp.float32)
    else:
        kernel = _invconv_kernel_mxu
        # f32 in -> f32 weight (full accuracy; kernel is HBM-bound anyway),
        # bf16 in -> bf16 weight (single-pass MXU).
        w_arg = w.astype(jnp.float32) if x.dtype == jnp.float32 else w.astype(x.dtype)

    z = pl.pallas_call(
        kernel,
        out_shape=jax.ShapeDtypeStruct((b, c, t), x.dtype),
        grid=grid,
        in_specs=[w_spec, x_spec],
        out_specs=o_spec,
        compiler_params=pltpu.CompilerParams(
            dimension_semantics=("parallel", "parallel"),
            vmem_limit_bytes=vmem_limit,
        ),
    )(w_arg, x)
    return z


def invconv_forward(params, x, x_mask=None, reverse=False):
    """InvConv.forward(x, x_mask, reverse) -> (z, logdet).

    Note: matching the PyTorch module, x_mask only affects logdet (via x_len);
    z is NOT masked by the module itself. logdet is computed in float32.
    """
    b, c, t = x.shape
    if x_mask is None:
        x_len = jnp.full((b,), t, dtype=jnp.float32)
    else:
        x_len = jnp.sum(x_mask.astype(jnp.float32), axis=(1, 2))
    w, dlogdet = get_weight(params, reverse=reverse)
    z = invconv_conv1d(x, w)
    logdet = (-dlogdet if reverse else dlogdet) * x_len
    return z, logdet


# ----------------------------------------------------------------------------
if __name__ == "__main__":
    # Small shapes consistent with the module: (batch, channels, time).
    b, channels, t = 2, 4, 16
    params = make_invconv_params(channels, seed=0)

    key = jax.random.PRNGKey(0)
    x = jax.random.normal(key, (b, channels, t), dtype=jnp.float32)

    z, logdet = invconv_forward(params, x)
    jax.block_until_ready(z)
    jax.block_until_ready(logdet)

    w, dlogdet = get_weight(params)
    z_ref = jnp.einsum("ij,bjt->bit", w, x)
    logdet_ref = dlogdet * jnp.full((b,), t, dtype=jnp.float32)
    assert np.allclose(np.asarray(z), np.asarray(z_ref), atol=1e-5, rtol=1e-5)
    assert np.allclose(np.asarray(logdet), np.asarray(logdet_ref),
                       atol=1e-5, rtol=1e-5)

    # Ragged-T tiled path (tile_t=512, last block out-of-range), small-C VPU kernel.
    t2 = 700
    x2 = jax.random.normal(jax.random.PRNGKey(1), (b, channels, t2),
                           dtype=jnp.float32)
    z2, _ = invconv_forward(params, x2)
    jax.block_until_ready(z2)
    z2_ref = jnp.einsum("ij,bjt->bit", w, x2)
    assert np.allclose(np.asarray(z2), np.asarray(z2_ref), atol=1e-5, rtol=1e-5)

    # bf16 input, VPU path (per-row f32 cast, bf16 output).
    x2b = x2.astype(jnp.bfloat16)
    z2b, _ = invconv_forward(params, x2b)
    jax.block_until_ready(z2b)
    z2b_ref = jnp.einsum("ij,bjt->bit", w, x2b.astype(jnp.float32)).astype(jnp.bfloat16)
    assert np.allclose(np.asarray(z2b, dtype=np.float32),
                       np.asarray(z2b_ref, dtype=np.float32),
                       atol=5e-2, rtol=5e-2)

    # Larger-C path exercising the MXU kernel, also with a ragged tail.
    c3, t3 = 32, 640
    params3 = make_invconv_params(c3, seed=1)
    x3 = jax.random.normal(jax.random.PRNGKey(2), (b, c3, t3),
                           dtype=jnp.float32)
    z3, _ = invconv_forward(params3, x3)
    jax.block_until_ready(z3)
    w3, _ = get_weight(params3)
    z3_ref = jnp.einsum("ij,bjt->bit", w3, x3)
    assert np.allclose(np.asarray(z3), np.asarray(z3_ref), atol=1e-4, rtol=1e-4)

    print("KERNEL_OK")
</pallas_src>

<mosaic_0001>
module attributes {stable_mosaic.version = 11 : i64} {
  func.func @_invconv_kernel_vpu(%arg0: i32, %arg1: i32, %arg2: memref<4x4xf32, #tpu.memory_space<vmem>>, %arg3: memref<1x4x16xf32, #tpu.memory_space<vmem>>, %arg4: memref<1x4x16xf32, #tpu.memory_space<vmem>>) attributes {dimension_semantics = [#tpu.dimension_semantics<parallel>, #tpu.dimension_semantics<parallel>], iteration_bounds = array<i64: 2, 1>, scalar_prefetch = 0 : i64, scratch_operands = 0 : i64, tpu.core_type = #tpu.core_type<tc>, window_params = [{pipeline_mode = #tpu.pipeline_mode<synchronous>, transform_indices = @transform_0, window_bounds = array<i64: 4, 4>}, {transform_indices = @transform_1, window_bounds = array<i64: 1, 4, 16>}, {transform_indices = @transform_2, window_bounds = array<i64: 1, 4, 16>}]} {
    %c0 = arith.constant 0 : index
    %c0_0 = arith.constant 0 : index
    %0 = vector.load %arg2[%c0, %c0_0] : memref<4x4xf32, #tpu.memory_space<vmem>>, vector<4x4xf32>
    %1 = vector.extract_strided_slice %0 {offsets = [0, 0], sizes = [4, 1], strides = [1, 1]} : vector<4x4xf32> to vector<4x1xf32>
    %c0_1 = arith.constant 0 : index
    %c0_2 = arith.constant 0 : index
    %c0_3 = arith.constant 0 : index
    %2 = vector.load %arg3[%c0_1, %c0_2, %c0_3] : memref<1x4x16xf32, #tpu.memory_space<vmem>>, vector<1x1x16xf32>
    %3 = vector.shape_cast %2 : vector<1x1x16xf32> to vector<1x16xf32>
    %4 = vector.broadcast %1 : vector<4x1xf32> to vector<4x16xf32>
    %5 = vector.broadcast %3 : vector<1x16xf32> to vector<4x16xf32>
    %6 = arith.mulf %4, %5 : vector<4x16xf32>
    %7 = vector.extract_strided_slice %0 {offsets = [0, 1], sizes = [4, 1], strides = [1, 1]} : vector<4x4xf32> to vector<4x1xf32>
    %c0_4 = arith.constant 0 : index
    %c1 = arith.constant 1 : index
    %c0_5 = arith.constant 0 : index
    %8 = vector.load %arg3[%c0_4, %c1, %c0_5] : memref<1x4x16xf32, #tpu.memory_space<vmem>>, vector<1x1x16xf32>
    %9 = vector.shape_cast %8 : vector<1x1x16xf32> to vector<1x16xf32>
    %10 = vector.broadcast %7 : vector<4x1xf32> to vector<4x16xf32>
    %11 = vector.broadcast %9 : vector<1x16xf32> to vector<4x16xf32>
    %12 = arith.mulf %10, %11 : vector<4x16xf32>
    %13 = arith.addf %6, %12 : vector<4x16xf32>
    %14 = vector.extract_strided_slice %0 {offsets = [0, 2], sizes = [4, 1], strides = [1, 1]} : vector<4x4xf32> to vector<4x1xf32>
    %c0_6 = arith.constant 0 : index
    %c2 = arith.constant 2 : index
    %c0_7 = arith.constant 0 : index
    %15 = vector.load %arg3[%c0_6, %c2, %c0_7] : memref<1x4x16xf32, #tpu.memory_space<vmem>>, vector<1x1x16xf32>
    %16 = vector.shape_cast %15 : vector<1x1x16xf32> to vector<1x16xf32>
    %17 = vector.broadcast %14 : vector<4x1xf32> to vector<4x16xf32>
    %18 = vector.broadcast %16 : vector<1x16xf32> to vector<4x16xf32>
    %19 = arith.mulf %17, %18 : vector<4x16xf32>
    %20 = arith.addf %13, %19 : vector<4x16xf32>
    %21 = vector.extract_strided_slice %0 {offsets = [0, 3], sizes = [4, 1], strides = [1, 1]} : vector<4x4xf32> to vector<4x1xf32>
    %c0_8 = arith.constant 0 : index
    %c3 = arith.constant 3 : index
    %c0_9 = arith.constant 0 : index
    %22 = vector.load %arg3[%c0_8, %c3, %c0_9] : memref<1x4x16xf32, #tpu.memory_space<vmem>>, vector<1x1x16xf32>
    %23 = vector.shape_cast %22 : vector<1x1x16xf32> to vector<1x16xf32>
    %24 = vector.broadcast %21 : vector<4x1xf32> to vector<4x16xf32>
    %25 = vector.broadcast %23 : vector<1x16xf32> to vector<4x16xf32>
    %26 = arith.mulf %24, %25 : vector<4x16xf32>
    %27 = arith.addf %20, %26 : vector<4x16xf32>
    %c0_10 = arith.constant 0 : index
    %c0_11 = arith.constant 0 : index
    %c0_12 = arith.constant 0 : index
    %28 = vector.load %arg4[%c0_10, %c0_11, %c0_12] : memref<1x4x16xf32, #tpu.memory_space<vmem>>, vector<1x4x16xf32>
    %29 = vector.shape_cast %28 : vector<1x4x16xf32> to vector<4x16xf32>
    %30 = vector.shape_cast %27 : vector<4x16xf32> to vector<1x4x16xf32>
    tpu.vector_store %arg4[%c0_10, %c0_11, %c0_12], %30 {strides = array<i32>} : memref<1x4x16xf32, #tpu.memory_space<vmem>>, vector<1x4x16xf32>,
    return
  }
  func.func @transform_0(%arg0: i32, %arg1: i32) -> (i32, i32) {
    %c0_i32 = arith.constant 0 : i32
    %c0_i32_0 = arith.constant 0 : i32
    %c0_i32_1 = arith.constant 0 : i32
    return %c0_i32, %c0_i32_0 : i32, i32
  }
  func.func @transform_1(%arg0: i32, %arg1: i32) -> (i32, i32, i32) {
    %c0_i32 = arith.constant 0 : i32
    %c0_i32_0 = arith.constant 0 : i32
    return %arg0, %c0_i32, %arg1 : i32, i32, i32
  }
  func.func @transform_2(%arg0: i32, %arg1: i32) -> (i32, i32, i32) {
    %c0_i32 = arith.constant 0 : i32
    %c0_i32_0 = arith.constant 0 : i32
    return %arg0, %c0_i32, %arg1 : i32, i32, i32
  }
}

</mosaic_0001>

<llo_original>
// kernel: tpu_custom_call.1
$region0: #{tpu_custom_call.1}
  #allocation0 [shape = 'u32[]', space=smem, size = 0x4, offset = 0x4, fixed_abs, tag = 'smem constant byte address 0x4 - core index']
  #allocation1 [shape = 'u32[144,128]{1,0:T(1,128)}', space=vmem, size = 0x12000, scoped, tag = 'internal scratch']
  %s0 = inlined_call_operand.hbm [shape: f32[4,4], index: 0, kind: input, shape index: {}]
  %s1 = inlined_call_operand.hbm [shape: f32[2,4,16], index: 1, kind: input, shape index: {}]
  %s2 = inlined_call_operand.hbm [shape: f32[2,4,16], index: 2, kind: output, shape index: {}]
  %s3 = sld [smem:[#allocation0]]
  $region49: #{tpu_custom_call.1} parent=0
    _
  %s5 = ssub.s32 1, %s3
  %s6 = scalar_select 0, %s5, %s3
  $region1: #{tpu_custom_call.1} parent=0
    #allocation2 [shape = 'u8[2048]{0}', space=vmem, size = 0x800, scoped, tag = 'input window, operand 0, single buffered']
    #allocation3 [shape = 's32[2]{0}', space=sflag, size = 0x8, scoped, tag = 'scoped memory for tpu_custom_call.1']
    #allocation4 [shape = 's32[2]{0}', space=sflag, size = 0x8, scoped, tag = 'scoped memory for tpu_custom_call.1']
    #allocation5 [shape = 'u8[4096]{0}', space=vmem, size = 0x1000, scoped, tag = 'input window, operand 1']
    #allocation6 [shape = 's32[2]{0}', space=sflag, size = 0x8, scoped, tag = 'scoped memory for tpu_custom_call.1']
    #allocation7 [shape = 'u8[4096]{0}', space=vmem, size = 0x1000, scoped, tag = 'output window, operand 0']
    %7 = vsyncpa [#allocation3], 0
    %8 = vsyncpa [#allocation6], 0
    %s9 = scalar_lea.sflag [#allocation6], 1
    %10 = vsyncpa %s9, 0
    %11 = vsyncpa [#allocation4], 0
    %s12 = scalar_lea.sflag [#allocation4], 1
    %13 = vsyncpa %s12, 0
    loop: start=0, step=1, limit=4
    $region2: #{tpu_custom_call.1} parent=1 // loop_pre_header
      _
    $region3: #{tpu_custom_call.1} parent=1 // loop_header
      %s15 = sphi 0, %s19
      %p16 = scmp.ge.s32.totalorder %s15, 4
      %s22 = sphi 0, %s34
      %s23 = sphi 0, %s30
      %s24 = sphi 0, %s22
      %s25 = sphi 0, %s23
      %s26 = sphi 0, %s24
      %s27 = sphi 0, %s25
      %s35 = sphi 0, %s35
      %s37 = sphi 0, %s35
      %s38 = sphi 0, %s37
      %s52 = sphi 0, %s38
      %s60 = sphi 0, %s62
      %s63 = sphi 0, %s60
      %s64 = sphi 0, %s63
      %s80 = sphi 0, %s64
      %s88 = sphi 0, %s90
      %s91 = sphi 0, %s88
      %s92 = sphi 0, %s91
      %s108 = sphi 0, %s92
    $region4: #{tpu_custom_call.1} parent=1 // loop_header_branch
      %18 = sbr.rel (%p16) target = $region8
    $region5: #{tpu_custom_call.1} parent=1 // loop_body
      %s20 = ssub.s32 %s15, 1
      %s21 = ssub.s32 %s15, 2
      %s28 = sadd.s32 1, %s23
      %p29 = scmp.ge.s32.totalorder %s28, 1
      %s30 = scalar_select %p29, 0, %s28
      %s31 = sadd.s32 1, %s22
      %s32 = scalar_select %p29, %s31, %s22
      %p33 = scmp.ge.s32.totalorder %s32, 2
      %s34 = scalar_select %p33, 0, %s32
      %s36 = sadd.s32 %s35, 1
      %p39 = scmp.eq.s32.totalorder %s15, 1
      %p40 = scmp.ne.s32.totalorder %s35, %s37
      %p41 = scmp.eq.s32.totalorder %s15, 0
      %p42 = por %p40, %p41
      %p43 = scmp.ne.s32.totalorder %s35, %s37
      %p44 = scmp.eq.s32.totalorder %s20, 1
      %p45 = por %p43, %p44
      %p46 = scmp.ne.s32.totalorder %s37, %s38
      %p47 = scmp.eq.s32.totalorder %s20, 0
      %p48 = por %p46, %p47
      %p49 = scmp.ne.s32.totalorder %s37, %s38
      %p50 = scmp.eq.s32.totalorder %s21, 1
      %p51 = por %p49, %p50
      %p53 = scmp.ne.s32.totalorder %s38, %s52
      %p54 = scmp.eq.s32.totalorder %s21, 0
      %p55 = por %p53, %p54
      %s56 = ssub.s32 %s22, %s34
      %s57 = ssub.s32 %s23, %s30
      %s58 = sor.u32 %s56, %s57
      %p59 = scmp.eq.s32.totalorder %s58, 0
      %s61 = sadd.s32 %s60, 1
      %s62 = scalar_select %p59, %s60, %s61
      %p65 = pneg %p59
      %p66 = scmp.eq.s32.totalorder %s15, 1
      %p67 = por %p65, %p66
      %p68 = scmp.ne.s32.totalorder %s60, %s63
      %p69 = scmp.eq.s32.totalorder %s15, 0
      %p70 = por %p68, %p69
      %p71 = scmp.ne.s32.totalorder %s60, %s63
      %p72 = scmp.eq.s32.totalorder %s20, 1
      %p73 = por %p71, %p72
      %p74 = scmp.ne.s32.totalorder %s63, %s64
      %p75 = scmp.eq.s32.totalorder %s20, 0
      %p76 = por %p74, %p75
      %p77 = scmp.ne.s32.totalorder %s63, %s64
      %p78 = scmp.eq.s32.totalorder %s21, 1
      %p79 = por %p77, %p78
      %p81 = scmp.ne.s32.totalorder %s64, %s80
      %p82 = scmp.eq.s32.totalorder %s21, 0
      %p83 = por %p81, %p82
      %s84 = ssub.s32 %s22, %s34
      %s85 = ssub.s32 %s23, %s30
      %s86 = sor.u32 %s84, %s85
      %p87 = scmp.eq.s32.totalorder %s86, 0
      %s89 = sadd.s32 %s88, 1
      %s90 = scalar_select %p87, %s88, %s89
      %p93 = pneg %p87
      %p94 = scmp.eq.s32.totalorder %s15, 1
      %p95 = por %p93, %p94
      %p96 = scmp.ne.s32.totalorder %s88, %s91
      %p97 = scmp.eq.s32.totalorder %s15, 0
      %p98 = por %p96, %p97
      %p99 = scmp.ne.s32.totalorder %s88, %s91
      %p100 = scmp.eq.s32.totalorder %s20, 1
      %p101 = por %p99, %p100
      %p102 = scmp.ne.s32.totalorder %s91, %s92
      %p103 = scmp.eq.s32.totalorder %s20, 0
      %p104 = por %p102, %p103
      %p105 = scmp.ne.s32.totalorder %s91, %s92
      %p106 = scmp.eq.s32.totalorder %s21, 1
      %p107 = por %p105, %p106
      %p109 = scmp.ne.s32.totalorder %s92, %s108
      %p110 = scmp.eq.s32.totalorder %s21, 0
      %p111 = por %p109, %p110
      %p112 = scmp.le.s32.totalorder 1, %s15
      %p113 = scmp.lt.s32.totalorder %s15, 3
      %p114 = pnand %p112, %p113
      %p115 = pneg %p114
      // Predicated region
      $region9: #{tpu_custom_call.1} parent=5 // pred_check
        _
      $region10: #{tpu_custom_call.1} parent=5 // pred_check_branch
        %117 = sbr.rel (%p114) target = $region12
      $region11: #{tpu_custom_call.1} parent=5 // pred_region
        %s118 = ssub.s32 %s15, 1
        // Predicated region
        $region13: #{tpu_custom_call.1} parent=11 // pred_check
          %p119 = pneg %p48
        $region14: #{tpu_custom_call.1} parent=11 // pred_check_branch
          %121 = sbr.rel (%p119) target = $region16
        $region15: #{tpu_custom_call.1} parent=11 // pred_region
          %s123 = ssub.s32 64, 64
          %124 = vsyncadd [#allocation3], %s123
          %s126 = sshll.u32 [#allocation2], 4
          %s127 = int_to_ptr.vmem [resolvable:$true] %s126
          %129 = dma.hbm_to_vmem [thread:$0]  %s0, 64, %s127, [#allocation3]
        $region16: #{tpu_custom_call.1} parent=11 // pred_fallthru
          _
      $region12: #{tpu_custom_call.1} parent=5 // pred_fallthru
        _
      %p130 = scmp.lt.s32.totalorder %s15, 2
      // Predicated region
      $region17: #{tpu_custom_call.1} parent=5 // pred_check
        %p131 = pneg %p130
      $region18: #{tpu_custom_call.1} parent=5 // pred_check_branch
        %133 = sbr.rel (%p131) target = $region20
      $region19: #{tpu_custom_call.1} parent=5 // pred_region
        // Predicated region
        $region21: #{tpu_custom_call.1} parent=19 // pred_check
          %p134 = pneg %p70
        $region22: #{tpu_custom_call.1} parent=19 // pred_check_branch
          %136 = sbr.rel (%p134) target = $region24
        $region23: #{tpu_custom_call.1} parent=19 // pred_region
          %s137 = sand.u32 %s60, 1
          %s138 = scalar_lea.sflag [#allocation6], %s137
          %s139 = sand.u32 %s60, 1
          %s140 = smul.addr %s139, 4
          %s141 = scalar_lea.vmem [#allocation5], %s140
          %s143 = ssub.s32 64, 64
          %144 = vsyncadd %s138, %s143
          %s145 = sadd.s32 %s23, %s22
          %s146 = smul.addr %s145, 64
          %s147 = scalar_lea.hbm %s1, %s146
          %s149 = sshll.u32 %s141, 4
          %s150 = int_to_ptr.vmem [resolvable:$true] %s149
          %152 = dma.hbm_to_vmem [thread:$0]  %s147, 64, %s150, %s138
        $region24: #{tpu_custom_call.1} parent=19 // pred_fallthru
          _
      $region20: #{tpu_custom_call.1} parent=5 // pred_fallthru
        _
      %p153 = scmp.le.s32.totalorder 1, %s15
      %p154 = scmp.lt.s32.totalorder %s15, 3
      %p155 = pnand %p153, %p154
      %p156 = pneg %p155
      // Predicated region
      $region25: #{tpu_custom_call.1} parent=5 // pred_check
        _
      $region26: #{tpu_custom_call.1} parent=5 // pred_check_branch
        %158 = sbr.rel (%p155) target = $region28
      $region27: #{tpu_custom_call.1} parent=5 // pred_region
        %s159 = ssub.s32 %s15, 1
        // Predicated region
        $region29: #{tpu_custom_call.1} parent=27 // pred_check
          %p160 = pneg %p48
        $region30: #{tpu_custom_call.1} parent=27 // pred_check_branch
          %162 = sbr.rel (%p160) target = $region32
        $region31: #{tpu_custom_call.1} parent=27 // pred_region
          %163 = dma.done [#allocation3], 64
        $region32: #{tpu_custom_call.1} parent=27 // pred_fallthru
          _
        %s164 = sand.u32 %s63, 1
        %s165 = scalar_lea.sflag [#allocation6], %s164
        %s166 = sand.u32 %s63, 1
        %s167 = smul.addr %s166, 4
        %s168 = scalar_lea.vmem [#allocation5], %s167
        // Predicated region
        $region33: #{tpu_custom_call.1} parent=27 // pred_check
          %p169 = pneg %p76
        $region34: #{tpu_custom_call.1} parent=27 // pred_check_branch
          %171 = sbr.rel (%p169) target = $region36
        $region35: #{tpu_custom_call.1} parent=27 // pred_region
          %172 = dma.done %s165, 64
        $region36: #{tpu_custom_call.1} parent=27 // pred_fallthru
          _
        %p173 = pneg %p48
        %p174 = pneg %p45
        %s175 = sand.u32 %s63, 1
        %s176 = scalar_lea.sflag [#allocation6], %s175
        %s177 = sand.u32 %s63, 1
        %s178 = smul.addr %s177, 4
        %s179 = scalar_lea.vmem [#allocation5], %s178
        %p180 = pneg %p76
        %p181 = pneg %p73
        %p182 = pneg %p104
        %p183 = pneg %p101
        %s184 = sand.u32 %s91, 1
        %s185 = scalar_lea.sflag [#allocation4], %s184
        %s186 = sand.u32 %s91, 1
        %s187 = smul.addr %s186, 4
        %s188 = scalar_lea.vmem [#allocation7], %s187
        %v189 = vld [vmem:[#allocation2] sm:$0xf]
        %v190 = vld [vmem:[%s168] sm:$0x1]
        %192 = vset.pattern.permute.xlu0 0
        %193 = vperm.xlu0 %192, %v189
        %v194 = vpop.permute.xlu0 %193
        %v196 = vlaneseq
        %v197 = vshrl.u32 %v196, 7
        %v198 = vsub.s32 0, %v197
        %v199 = vrot.slane %v190, %v198
        %v200 = vmul.f32 %v194, %v199
        %v201 = vld [vmem:[%s168 + $0x1] sm:$0x1]
        %202 = vset.pattern.permute.xlu0 1
        %203 = vperm.xlu0 %202, %v189
        %v204 = vpop.permute.xlu0 %203
        %v206 = vlaneseq
        %v207 = vshrl.u32 %v206, 7
        %v208 = vsub.s32 0, %v207
        %v209 = vrot.slane %v201, %v208
        %v210 = vmul.f32 %v204, %v209
        %v211 = vadd.f32 %v200, %v210
        %v212 = vld [vmem:[%s168 + $0x2] sm:$0x1]
        %213 = vset.pattern.permute.xlu0 2
        %214 = vperm.xlu0 %213, %v189
        %v215 = vpop.permute.xlu0 %214
        %v217 = vlaneseq
        %v218 = vshrl.u32 %v217, 7
        %v219 = vsub.s32 0, %v218
        %v220 = vrot.slane %v212, %v219
        %v221 = vmul.f32 %v215, %v220
        %v222 = vadd.f32 %v211, %v221
        %v223 = vld [vmem:[%s168 + $0x3] sm:$0x1]
        %224 = vset.pattern.permute.xlu0 3
        %225 = vperm.xlu0 %224, %v189
        %v226 = vpop.permute.xlu0 %225
        %v228 = vlaneseq
        %v229 = vshrl.u32 %v228, 7
        %v230 = vsub.s32 0, %v229
        %v231 = vrot.slane %v223, %v230
        %v232 = vmul.f32 %v226, %v231
        %v233 = vadd.f32 %v222, %v232
        %vm234 = vcmask 125952
        %235 = vst.msk [vmem:[%s188] sm:$0xf] %vm234, %v233
        %s236 = sand.u32 %s91, 1
        %s237 = scalar_lea.sflag [#allocation4], %s236
        %s238 = sand.u32 %s91, 1
        %s239 = smul.addr %s238, 4
        %s240 = scalar_lea.vmem [#allocation7], %s239
        // Predicated region
        $region37: #{tpu_custom_call.1} parent=27 // pred_check
          %p241 = pneg %p101
        $region38: #{tpu_custom_call.1} parent=27 // pred_check_branch
          %243 = sbr.rel (%p241) target = $region40
        $region39: #{tpu_custom_call.1} parent=27 // pred_region
          %s245 = ssub.s32 64, 64
          %246 = vsyncadd %s237, %s245
          %s247 = sadd.s32 %s25, %s24
          %s248 = smul.addr %s247, 64
          %s249 = scalar_lea.hbm %s2, %s248
          %s251 = sshll.u32 %s240, 4
          %s252 = int_to_ptr.vmem [resolvable:$true] %s251
          %254 = dma.vmem_to_hbm [thread:$0]  %s252, 64, %s249, %s237
        $region40: #{tpu_custom_call.1} parent=27 // pred_fallthru
          _
      $region28: #{tpu_custom_call.1} parent=5 // pred_fallthru
        _
      %p255 = scmp.le.s32.totalorder 2, %s15
      // Predicated region
      $region41: #{tpu_custom_call.1} parent=5 // pred_check
        %p256 = pneg %p255
      $region42: #{tpu_custom_call.1} parent=5 // pred_check_branch
        %258 = sbr.rel (%p256) target = $region44
      $region43: #{tpu_custom_call.1} parent=5 // pred_region
        %s259 = ssub.s32 %s15, 2
        // Predicated region
        $region45: #{tpu_custom_call.1} parent=43 // pred_check
          %p260 = pneg %p107
        $region46: #{tpu_custom_call.1} parent=43 // pred_check_branch
          %262 = sbr.rel (%p260) target = $region48
        $region47: #{tpu_custom_call.1} parent=43 // pred_region
          %s263 = sand.u32 %s92, 1
          %s264 = scalar_lea.sflag [#allocation4], %s263
          %s265 = sand.u32 %s92, 1
          %s266 = smul.addr %s265, 4
          %s267 = scalar_lea.vmem [#allocation7], %s266
          %268 = dma.done %s264, 64
        $region48: #{tpu_custom_call.1} parent=43 // pred_fallthru
          _
      $region44: #{tpu_custom_call.1} parent=5 // pred_fallthru
        _
    $region6: #{tpu_custom_call.1} parent=1 // loop_footer
      %s19 = sadd.s32 1, %s15
    $region7: #{tpu_custom_call.1} parent=1 // loop_footer_branch
      %14 = sbr.rel target = $region3
    $region8: #{tpu_custom_call.1} parent=1 // loop_exit
      _
    %269 = vsyncpa [#allocation3], 1
    %s270 = scalar_lea.sflag [#allocation3], 1
    %271 = vsyncpa %s270, 1
    %272 = vsyncpa [#allocation6], 1
    %s273 = scalar_lea.sflag [#allocation6], 1
    %274 = vsyncpa %s273, 1
    %275 = vsyncpa [#allocation4], 1
    %s276 = scalar_lea.sflag [#allocation4], 1
    %277 = vsyncpa %s276, 1

</llo_original>
